<compile_context>
chip_gen: v7x
topology: tpu7x:2x2x1
jax: 0.10.0
libtpu: 0.0.40
codegen_flags: <defaults>
</compile_context>

<pallas_src>
import functools

import jax
import jax.numpy as jnp
from jax.experimental import pallas as pl
from jax.experimental.pallas import tpu as pltpu

NUM_CLASSES = 18
IGNORE_INDEX = -100

_VMEM_BUDGET_BYTES = 24 * 1024 * 1024   # padded, double-buffered working-set target
_VMEM_LIMIT_CAP = 48 * 1024 * 1024      # never request more scoped VMEM than this


def _ceil_to(x, m):
    return -(-x // m) * m


def _padded_block_bytes(lead, rows, lanes, dtype):
    """VMEM bytes of one (lead, rows, lanes) block incl. sublane/lane padding."""
    isz = jnp.dtype(dtype).itemsize
    row_tile = 8 * max(1, 4 // isz)          # 8 rows f32/int32, 16 rows bf16
    return lead * _ceil_to(rows, row_tile) * _ceil_to(lanes, 128) * isz


def _footprint_bytes(b_tile, num_classes, t_tile, logits_dtype):
    """Double-buffered VMEM footprint of all pipelined blocks."""
    logits = _padded_block_bytes(b_tile, num_classes, t_tile, logits_dtype)
    targets = _padded_block_bytes(b_tile, 1, t_tile, jnp.int32)
    weights = _padded_block_bytes(1, num_classes, 1, jnp.float32)
    out = _padded_block_bytes(1, 1, t_tile, jnp.float32)
    return 2 * (logits + targets + weights + out)


def _choose_tiles(B, C, T, logits_dtype):
    fp = lambda bt, tt: _footprint_bytes(bt, C, tt, logits_dtype)

    # Lane tile: prefer the whole row (one long contiguous DMA run per (b, c)
    # pair); otherwise the largest 128-multiple divisor of T that fits the
    # (honestly-accounted) VMEM budget.
    if fp(1, T) <= _VMEM_BUDGET_BYTES:
        t_tile = T
    else:
        t_tile = None
        tt = (min(T - 1, 64 * 1024) // 128) * 128
        while tt >= 128:
            if T % tt == 0 and fp(1, tt) <= _VMEM_BUDGET_BYTES:
                t_tile = tt
                break
            tt -= 128
        if t_tile is None:
            raise ValueError(
                f"T={T} has no 128-multiple divisor whose block fits the "
                f"{_VMEM_BUDGET_BYTES >> 20} MiB VMEM budget; pad T or pass t_tile.")

    # Batch tile: largest divisor of B keeping the padded footprint in budget.
    b_tile = 1
    for d in range(1, B + 1):
        if B % d == 0 and fp(d, t_tile) <= _VMEM_BUDGET_BYTES:
            b_tile = d

    # Guarantee >= 2 grid points so both TensorCores of a v7x chip (both grid
    # axes are marked "parallel") always get work.
    if (B // b_tile) * (T // t_tile) < 2:
        if B >= 2:
            b_tile = max(d for d in range(1, B // 2 + 1) if B % d == 0)
        else:
            half_cap = (T // 2 // 128) * 128
            for tt in range(half_cap, 127, -128):
                if T % tt == 0:
                    t_tile = tt
                    break
    return b_tile, t_tile


def _weighted_nll_kernel(logits_ref, targets_ref, weights_ref, out_ref, *, active):
    # logits_ref : (BT, C, TT) log-probabilities, native [B, C, T] layout slab
    # targets_ref: (BT, 1, TT) int32 class ids (IGNORE_INDEX matches no class)
    # weights_ref: (1,  C, 1 ) f32 per-class weights (statically unused if inactive)
    # out_ref    : (1,  1, TT) f32 per-lane partial of -sum(w * logp); each grid
    #              point owns a distinct output block (no accumulation needed).
    logp = logits_ref[...]                                   # keep packed input dtype
    tgt = targets_ref[...]
    cls = jax.lax.broadcasted_iota(jnp.int32, logp.shape, 1)
    onehot = cls == tgt                                      # all-False for ignored tokens

    # Exactly one class matches per token, so select + class-reduce in the
    # packed input dtype (bf16: 2x VPU width) is bit-identical to picking in
    # f32; cast only the reduced (BT, 1, TT) tensor.
    picked = jnp.sum(jnp.where(onehot, logp, jnp.zeros_like(logp)),
                     axis=1, keepdims=True).astype(jnp.float32)   # (BT, 1, TT)

    if active:
        # Gather w[target] with the same one-hot (f32 select + reduce) and
        # multiply AFTER the class reduction; ignored tokens get w_sel == 0.
        w = weights_ref[...]                                  # (1, C, 1) f32
        w_sel = jnp.sum(jnp.where(onehot, w, 0.0), axis=1, keepdims=True)
        picked = picked * w_sel

    out_ref[...] = -jnp.sum(picked, axis=0, keepdims=True)    # (1, 1, TT)


def adaptive_class_balanced_loss(logits_bct, targets_bt, dynamic_weights, *,
                                 is_active=False, ignore_index=IGNORE_INDEX,
                                 b_tile=None, t_tile=None):
    """Pallas equivalent of AdaptiveClassBalancedLoss.forward (smoothing=0.0).

    logits_bct      : [B, C, T] log-probabilities (trainer layout, f32 or bf16)
    targets_bt      : [B, T]    int class ids (ignore_index allowed)
    dynamic_weights : [C]       per-class weights buffer
    is_active       : Python bool, mirrors the module's self.is_active flag
    """
    B, C, T = logits_bct.shape
    assert dynamic_weights.shape == (C,)
    assert targets_bt.shape == (B, T)
    # Ignored tokens rely on "iota never matches", so ignore_index must lie
    # outside [0, C) (true for the -100 default).  Out-of-range positive
    # targets contribute 0 here (the PyTorch reference would raise).
    assert ignore_index < 0 or ignore_index >= C

    auto_b, auto_t = _choose_tiles(B, C, T, logits_bct.dtype)
    if t_tile is None:
        t_tile = auto_t
    if b_tile is None:
        b_tile = auto_b
    assert T % t_tile == 0 and (t_tile == T or t_tile % 128 == 0), (T, t_tile)
    assert B % b_tile == 0, (B, b_tile)

    nb, nt = B // b_tile, T // t_tile

    # Only the tiny side inputs get reshaped/cast; the big logits slab is fed
    # to the kernel untouched (no transpose, no cast, no pad -> one HBM read).
    targets3 = targets_bt.reshape(B, 1, T).astype(jnp.int32)
    weights3 = dynamic_weights.astype(jnp.float32).reshape(1, C, 1)

    footprint = _footprint_bytes(b_tile, C, t_tile, logits_bct.dtype)
    vmem_limit = int(min(_VMEM_LIMIT_CAP,
                         max(32 * 1024 * 1024,
                             footprint + footprint // 2 + (2 << 20))))

    partials = pl.pallas_call(
        functools.partial(_weighted_nll_kernel, active=bool(is_active)),
        out_shape=jax.ShapeDtypeStruct((nb * nt, 1, t_tile), jnp.float32),
        grid_spec=pltpu.PrefetchScalarGridSpec(
            num_scalar_prefetch=0,
            grid=(nb, nt),
            in_specs=[
                pl.BlockSpec((b_tile, C, t_tile), lambda i, j: (i, 0, j)),
                pl.BlockSpec((b_tile, 1, t_tile), lambda i, j: (i, 0, j)),
                pl.BlockSpec((1, C, 1), lambda i, j: (0, 0, 0)),
            ],
            out_specs=pl.BlockSpec((1, 1, t_tile),
                                   lambda i, j, nt=nt: (i * nt + j, 0, 0)),
        ),
        compiler_params=pltpu.CompilerParams(
            dimension_semantics=("parallel", "parallel"),
            vmem_limit_bytes=vmem_limit),
    )(logits_bct, targets3, weights3)

    # Tiny final reduction (B*T/b_tile floats) in plain XLA.
    return jnp.sum(partials)


def _reference_loss(logits_bct, targets_bt, weights):
    """Pure-JAX reference mirroring F.nll_loss(..., weight=w, reduction='sum')."""
    B, C, T = logits_bct.shape
    logp = jnp.transpose(logits_bct, (0, 2, 1)).reshape(-1, C).astype(jnp.float32)
    tgt = targets_bt.reshape(-1)
    valid = tgt != IGNORE_INDEX
    safe_tgt = jnp.clip(tgt, 0, C - 1)
    picked = jnp.take_along_axis(logp, safe_tgt[:, None], axis=1)[:, 0]
    per_tok = -weights.astype(jnp.float32)[safe_tgt] * picked
    return jnp.sum(jnp.where(valid, per_tok, 0.0))


if __name__ == "__main__":
    key = jax.random.PRNGKey(0)
    C = NUM_CLASSES
    k1, k2, k3, k4, k5, k6 = jax.random.split(key, 6)

    # ---- small shape matching the module -----------------------------------
    B, T = 2, 8
    # The module treats logits as already-computed log-probabilities (it calls
    # F.nll_loss directly), so build log-softmax inputs in trainer layout.
    raw = jax.random.normal(k1, (B, T, C), dtype=jnp.float32)
    log_probs = jax.nn.log_softmax(raw, axis=-1)
    logits_bct = jnp.transpose(log_probs, (0, 2, 1))          # [B, C, T]
    targets = jax.random.randint(k2, (B, T), 0, C, dtype=jnp.int32)
    targets = targets.at[0, 0].set(IGNORE_INDEX)              # exercise ignore_index
    targets = targets.at[1, 3].set(IGNORE_INDEX)

    # Buffer from __init__: dynamic_weights = ones(num_classes)
    dynamic_weights = jnp.ones((C,), dtype=jnp.float32)

    # 1) Inactive path (module default: plain unweighted NLL sum w/ ignore_index)
    loss_inactive = adaptive_class_balanced_loss(
        logits_bct, targets, dynamic_weights, is_active=False)
    jax.block_until_ready(loss_inactive)
    ref_inactive = _reference_loss(logits_bct, targets, jnp.ones((C,), jnp.float32))
    assert abs(float(loss_inactive) - float(ref_inactive)) < 1e-3, (
        float(loss_inactive), float(ref_inactive))

    # 2) Active path with non-trivial dynamic weights (post _update_dynamic_weights)
    active_weights = 1.0 + 0.1 * jnp.arange(C, dtype=jnp.float32)
    active_weights = active_weights * C / jnp.sum(active_weights)  # module normalization
    loss_active = adaptive_class_balanced_loss(
        logits_bct, targets, active_weights, is_active=True)
    jax.block_until_ready(loss_active)
    ref_active = _reference_loss(logits_bct, targets, active_weights)
    assert abs(float(loss_active) - float(ref_active)) < 1e-3, (
        float(loss_active), float(ref_active))

    # 3) Multi-tile grid (2 x 2) with explicit tiles, bf16 logits end-to-end,
    #    exercising the per-(i,j) output index map.
    B2, T2 = 4, 256
    raw2 = jax.random.normal(k3, (B2, T2, C), dtype=jnp.float32)
    logp2 = jax.nn.log_softmax(raw2, axis=-1).astype(jnp.bfloat16)
    logits2_bct = jnp.transpose(logp2, (0, 2, 1))             # [B, C, T] bf16
    targets2 = jax.random.randint(k4, (B2, T2), 0, C, dtype=jnp.int32)
    targets2 = targets2.at[0, :5].set(IGNORE_INDEX)

    loss2 = adaptive_class_balanced_loss(
        logits2_bct, targets2, active_weights, is_active=True, b_tile=2, t_tile=128)
    jax.block_until_ready(loss2)
    ref2 = _reference_loss(logits2_bct, targets2, active_weights)
    assert abs(float(loss2) - float(ref2)) < 1e-2 + 1e-4 * abs(float(ref2)), (
        float(loss2), float(ref2))

    # 4) Auto-chosen tiles, bf16, active path (exercises the padded-VMEM tile
    #    picker and the "at least 2 grid points" rule).
    B3, T3 = 4, 512
    raw3 = jax.random.normal(k5, (B3, T3, C), dtype=jnp.float32)
    logp3 = jax.nn.log_softmax(raw3, axis=-1).astype(jnp.bfloat16)
    logits3_bct = jnp.transpose(logp3, (0, 2, 1))
    targets3 = jax.random.randint(k6, (B3, T3), 0, C, dtype=jnp.int32)
    targets3 = targets3.at[2, 10:20].set(IGNORE_INDEX)

    loss3 = adaptive_class_balanced_loss(
        logits3_bct, targets3, active_weights, is_active=True)
    jax.block_until_ready(loss3)
    ref3 = _reference_loss(logits3_bct, targets3, active_weights)
    assert abs(float(loss3) - float(ref3)) < 1e-2 + 1e-4 * abs(float(ref3)), (
        float(loss3), float(ref3))

    # TODO(synk): update_accuracy_stats / _update_dynamic_weights / check_activation /
    # status printing are host-side training-time bookkeeping (Python dicts, prints,
    # EMA buffers) and the smoothing>0 LabelSmoothingLoss branch is unused at the
    # module default; only the forward loss hot path is implemented as a Pallas kernel.
    print("KERNEL_OK")
</pallas_src>

<mosaic_0001>
module attributes {stable_mosaic.version = 11 : i64} {
  func.func @_weighted_nll_kernel(%arg0: i32, %arg1: i32, %arg2: memref<1x18x8xf32, #tpu.memory_space<vmem>>, %arg3: memref<1x1x8xi32, #tpu.memory_space<vmem>>, %arg4: memref<1x18x1xf32, #tpu.memory_space<vmem>>, %arg5: memref<1x1x8xf32, #tpu.memory_space<vmem>>) attributes {dimension_semantics = [#tpu.dimension_semantics<parallel>, #tpu.dimension_semantics<parallel>], iteration_bounds = array<i64: 2, 1>, scalar_prefetch = 0 : i64, scratch_operands = 0 : i64, tpu.core_type = #tpu.core_type<tc>, window_params = [{transform_indices = @transform_0, window_bounds = array<i64: 1, 18, 8>}, {transform_indices = @transform_1, window_bounds = array<i64: 1, 1, 8>}, {pipeline_mode = #tpu.pipeline_mode<synchronous>, transform_indices = @transform_2, window_bounds = array<i64: 1, 18, 1>}, {transform_indices = @transform_3, window_bounds = array<i64: 1, 1, 8>}]} {
    %c0 = arith.constant 0 : index
    %c0_0 = arith.constant 0 : index
    %c0_1 = arith.constant 0 : index
    %0 = vector.load %arg2[%c0, %c0_0, %c0_1] : memref<1x18x8xf32, #tpu.memory_space<vmem>>, vector<1x18x8xf32>
    %c0_2 = arith.constant 0 : index
    %c0_3 = arith.constant 0 : index
    %c0_4 = arith.constant 0 : index
    %1 = vector.load %arg3[%c0_2, %c0_3, %c0_4] : memref<1x1x8xi32, #tpu.memory_space<vmem>>, vector<1x1x8xi32>
    %2 = tpu.iota {dimensions = array<i32: 1>} : vector<1x18x8xi32>
    %3 = vector.broadcast %1 : vector<1x1x8xi32> to vector<1x18x8xi32>
    %4 = arith.cmpi eq, %2, %3 : vector<1x18x8xi32>
    %cst = arith.constant 0.000000e+00 : f32
    %5 = vector.broadcast %cst : f32 to vector<1x18x8xf32>
    %6 = arith.select %4, %0, %5 : vector<1x18x8xi1>, vector<1x18x8xf32>
    %cst_5 = arith.constant dense<0.000000e+00> : vector<1x8xf32>
    %7 = vector.multi_reduction <add>, %6, %cst_5 [1] : vector<1x18x8xf32> to vector<1x8xf32>
    %8 = vector.shape_cast %7 : vector<1x8xf32> to vector<1x1x8xf32>
    %cst_6 = arith.constant dense<0.000000e+00> : vector<1x8xf32>
    %9 = vector.multi_reduction <add>, %8, %cst_6 [0] : vector<1x1x8xf32> to vector<1x8xf32>
    %10 = vector.shape_cast %9 : vector<1x8xf32> to vector<1x1x8xf32>
    %cst_7 = arith.constant 0.000000e+00 : f32
    %11 = vector.broadcast %cst_7 : f32 to vector<1x1x8xf32>
    %12 = arith.subf %11, %10 : vector<1x1x8xf32>
    %c0_8 = arith.constant 0 : index
    %c0_9 = arith.constant 0 : index
    %c0_10 = arith.constant 0 : index
    %13 = vector.load %arg5[%c0_8, %c0_9, %c0_10] : memref<1x1x8xf32, #tpu.memory_space<vmem>>, vector<1x1x8xf32>
    tpu.vector_store %arg5[%c0_8, %c0_9, %c0_10], %12 {strides = array<i32>} : memref<1x1x8xf32, #tpu.memory_space<vmem>>, vector<1x1x8xf32>,
    return
  }
  func.func @transform_0(%arg0: i32, %arg1: i32) -> (i32, i32, i32) {
    %c0_i32 = arith.constant 0 : i32
    %c0_i32_0 = arith.constant 0 : i32
    return %arg0, %c0_i32, %arg1 : i32, i32, i32
  }
  func.func @transform_1(%arg0: i32, %arg1: i32) -> (i32, i32, i32) {
    %c0_i32 = arith.constant 0 : i32
    %c0_i32_0 = arith.constant 0 : i32
    return %arg0, %c0_i32, %arg1 : i32, i32, i32
  }
  func.func @transform_2(%arg0: i32, %arg1: i32) -> (i32, i32, i32) {
    %c0_i32 = arith.constant 0 : i32
    %c0_i32_0 = arith.constant 0 : i32
    %c0_i32_1 = arith.constant 0 : i32
    %c0_i32_2 = arith.constant 0 : i32
    return %c0_i32, %c0_i32_0, %c0_i32_1 : i32, i32, i32
  }
  func.func @transform_3(%arg0: i32, %arg1: i32) -> (i32, i32, i32) {
    %c1_i32 = arith.constant 1 : i32
    %0 = arith.muli %arg0, %c1_i32 : i32
    %1 = arith.addi %0, %arg1 : i32
    %c0_i32 = arith.constant 0 : i32
    %c0_i32_0 = arith.constant 0 : i32
    %c0_i32_1 = arith.constant 0 : i32
    return %1, %c0_i32, %c0_i32_0 : i32, i32, i32
  }
}

</mosaic_0001>

<llo_original>
// kernel: tpu_custom_call.1
$region0: #{tpu_custom_call.1}
  #allocation0 [shape = 'u32[]', space=smem, size = 0x4, offset = 0x4, fixed_abs, tag = 'smem constant byte address 0x4 - core index']
  #allocation1 [shape = 'u32[144,128]{1,0:T(1,128)}', space=vmem, size = 0x12000, scoped, tag = 'internal scratch']
  %s0 = inlined_call_operand.vmem [shape: f32[2,18,8], index: 0, kind: input, shape index: {}]
  %s1 = inlined_call_operand.vmem [shape: s32[2,1,8], index: 1, kind: input, shape index: {}]
  %s2 = inlined_call_operand.vmem [shape: f32[1,18,1], index: 2, kind: input, shape index: {}]
  %s3 = inlined_call_operand.hbm [shape: f32[2,1,8], index: 3, kind: output, shape index: {}]
  %s4 = sld [smem:[#allocation0]]
  $region45: #{tpu_custom_call.1} parent=0
    _
  %s6 = ssub.s32 1, %s4
  %s7 = scalar_select 0, %s6, %s4
  $region1: #{tpu_custom_call.1} parent=0
    #allocation2 [shape = 'u8[1024]{0}', space=vmem, size = 0x400, scoped, tag = 'output window, operand 0']
    #allocation3 [shape = 's32[2]{0}', space=sflag, size = 0x8, scoped, tag = 'scoped memory for tpu_custom_call.1']
    %8 = vsyncpa [#allocation3], 0
    %s9 = scalar_lea.sflag [#allocation3], 1
    %10 = vsyncpa %s9, 0
    loop: start=0, step=1, limit=4
    $region2: #{tpu_custom_call.1} parent=1 // loop_pre_header
      _
    $region3: #{tpu_custom_call.1} parent=1 // loop_header
      %s12 = sphi 0, %s16
      %p13 = scmp.ge.s32.totalorder %s12, 4
      %s19 = sphi 0, %s31
      %s20 = sphi 0, %s27
      %s21 = sphi 0, %s19
      %s22 = sphi 0, %s20
      %s23 = sphi 0, %s21
      %s24 = sphi 0, %s22
      %s36 = sphi 0, %s38
      %s39 = sphi 0, %s36
      %s40 = sphi 0, %s39
      %s56 = sphi 0, %s40
      %s64 = sphi 0, %s66
      %s67 = sphi 0, %s64
      %s68 = sphi 0, %s67
      %s84 = sphi 0, %s68
      %s88 = sphi 0, %s88
      %s90 = sphi 0, %s88
      %s91 = sphi 0, %s90
      %s105 = sphi 0, %s91
      %s113 = sphi 0, %s115
      %s116 = sphi 0, %s113
      %s117 = sphi 0, %s116
      %s133 = sphi 0, %s117
    $region4: #{tpu_custom_call.1} parent=1 // loop_header_branch
      %15 = sbr.rel (%p13) target = $region8
    $region5: #{tpu_custom_call.1} parent=1 // loop_body
      %s17 = ssub.s32 %s12, 1
      %s18 = ssub.s32 %s12, 2
      %s25 = sadd.s32 1, %s20
      %p26 = scmp.ge.s32.totalorder %s25, 1
      %s27 = scalar_select %p26, 0, %s25
      %s28 = sadd.s32 1, %s19
      %s29 = scalar_select %p26, %s28, %s19
      %p30 = scmp.ge.s32.totalorder %s29, 2
      %s31 = scalar_select %p30, 0, %s29
      %s32 = ssub.s32 %s19, %s31
      %s33 = ssub.s32 %s20, %s27
      %s34 = sor.u32 %s32, %s33
      %p35 = scmp.eq.s32.totalorder %s34, 0
      %s37 = sadd.s32 %s36, 1
      %s38 = scalar_select %p35, %s36, %s37
      %p41 = pneg %p35
      %p42 = scmp.eq.s32.totalorder %s12, 1
      %p43 = por %p41, %p42
      %p44 = scmp.ne.s32.totalorder %s36, %s39
      %p45 = scmp.eq.s32.totalorder %s12, 0
      %p46 = por %p44, %p45
      %p47 = scmp.ne.s32.totalorder %s36, %s39
      %p48 = scmp.eq.s32.totalorder %s17, 1
      %p49 = por %p47, %p48
      %p50 = scmp.ne.s32.totalorder %s39, %s40
      %p51 = scmp.eq.s32.totalorder %s17, 0
      %p52 = por %p50, %p51
      %p53 = scmp.ne.s32.totalorder %s39, %s40
      %p54 = scmp.eq.s32.totalorder %s18, 1
      %p55 = por %p53, %p54
      %p57 = scmp.ne.s32.totalorder %s40, %s56
      %p58 = scmp.eq.s32.totalorder %s18, 0
      %p59 = por %p57, %p58
      %s60 = ssub.s32 %s19, %s31
      %s61 = ssub.s32 %s20, %s27
      %s62 = sor.u32 %s60, %s61
      %p63 = scmp.eq.s32.totalorder %s62, 0
      %s65 = sadd.s32 %s64, 1
      %s66 = scalar_select %p63, %s64, %s65
      %p69 = pneg %p63
      %p70 = scmp.eq.s32.totalorder %s12, 1
      %p71 = por %p69, %p70
      %p72 = scmp.ne.s32.totalorder %s64, %s67
      %p73 = scmp.eq.s32.totalorder %s12, 0
      %p74 = por %p72, %p73
      %p75 = scmp.ne.s32.totalorder %s64, %s67
      %p76 = scmp.eq.s32.totalorder %s17, 1
      %p77 = por %p75, %p76
      %p78 = scmp.ne.s32.totalorder %s67, %s68
      %p79 = scmp.eq.s32.totalorder %s17, 0
      %p80 = por %p78, %p79
      %p81 = scmp.ne.s32.totalorder %s67, %s68
      %p82 = scmp.eq.s32.totalorder %s18, 1
      %p83 = por %p81, %p82
      %p85 = scmp.ne.s32.totalorder %s68, %s84
      %p86 = scmp.eq.s32.totalorder %s18, 0
      %p87 = por %p85, %p86
      %s89 = sadd.s32 %s88, 1
      %p92 = scmp.eq.s32.totalorder %s12, 1
      %p93 = scmp.ne.s32.totalorder %s88, %s90
      %p94 = scmp.eq.s32.totalorder %s12, 0
      %p95 = por %p93, %p94
      %p96 = scmp.ne.s32.totalorder %s88, %s90
      %p97 = scmp.eq.s32.totalorder %s17, 1
      %p98 = por %p96, %p97
      %p99 = scmp.ne.s32.totalorder %s90, %s91
      %p100 = scmp.eq.s32.totalorder %s17, 0
      %p101 = por %p99, %p100
      %p102 = scmp.ne.s32.totalorder %s90, %s91
      %p103 = scmp.eq.s32.totalorder %s18, 1
      %p104 = por %p102, %p103
      %p106 = scmp.ne.s32.totalorder %s91, %s105
      %p107 = scmp.eq.s32.totalorder %s18, 0
      %p108 = por %p106, %p107
      %s109 = sadd.s32 %s19, %s20
      %s110 = sadd.s32 %s31, %s27
      %s111 = ssub.s32 %s109, %s110
      %p112 = scmp.eq.s32.totalorder %s111, 0
      %s114 = sadd.s32 %s113, 1
      %s115 = scalar_select %p112, %s113, %s114
      %p118 = pneg %p112
      %p119 = scmp.eq.s32.totalorder %s12, 1
      %p120 = por %p118, %p119
      %p121 = scmp.ne.s32.totalorder %s113, %s116
      %p122 = scmp.eq.s32.totalorder %s12, 0
      %p123 = por %p121, %p122
      %p124 = scmp.ne.s32.totalorder %s113, %s116
      %p125 = scmp.eq.s32.totalorder %s17, 1
      %p126 = por %p124, %p125
      %p127 = scmp.ne.s32.totalorder %s116, %s117
      %p128 = scmp.eq.s32.totalorder %s17, 0
      %p129 = por %p127, %p128
      %p130 = scmp.ne.s32.totalorder %s116, %s117
      %p131 = scmp.eq.s32.totalorder %s18, 1
      %p132 = por %p130, %p131
      %p134 = scmp.ne.s32.totalorder %s117, %s133
      %p135 = scmp.eq.s32.totalorder %s18, 0
      %p136 = por %p134, %p135
      %p137 = scmp.le.s32.totalorder 1, %s12
      %p138 = scmp.lt.s32.totalorder %s12, 3
      %p139 = pnand %p137, %p138
      %p140 = pneg %p139
      // Predicated region
      $region9: #{tpu_custom_call.1} parent=5 // pred_check
        _
      $region10: #{tpu_custom_call.1} parent=5 // pred_check_branch
        %142 = sbr.rel (%p139) target = $region12
      $region11: #{tpu_custom_call.1} parent=5 // pred_region
        %s143 = ssub.s32 %s12, 1
        // Predicated region
        $region13: #{tpu_custom_call.1} parent=11 // pred_check
          %p144 = pneg %p101
        $region14: #{tpu_custom_call.1} parent=11 // pred_check_branch
          %146 = sbr.rel (%p144) target = $region16
        $region15: #{tpu_custom_call.1} parent=11 // pred_region
          _
        $region16: #{tpu_custom_call.1} parent=11 // pred_fallthru
          _
      $region12: #{tpu_custom_call.1} parent=5 // pred_fallthru
        _
      %p147 = scmp.lt.s32.totalorder %s12, 2
      // Predicated region
      $region17: #{tpu_custom_call.1} parent=5 // pred_check
        %p148 = pneg %p147
      $region18: #{tpu_custom_call.1} parent=5 // pred_check_branch
        %150 = sbr.rel (%p148) target = $region20
      $region19: #{tpu_custom_call.1} parent=5 // pred_region
        // Predicated region
        $region21: #{tpu_custom_call.1} parent=19 // pred_check
          %p151 = pneg %p46
        $region22: #{tpu_custom_call.1} parent=19 // pred_check_branch
          %153 = sbr.rel (%p151) target = $region24
        $region23: #{tpu_custom_call.1} parent=19 // pred_region
          %p154 = scmp.lt.s32.totalorder %s19, 1
          %s155 = scalar_select %p154, %s19, 1
          %p156 = scmp.lt.s32.totalorder %s20, 0
          %s157 = scalar_select %p156, %s20, 0
          %s158 = smul.addr %s155, 3
          %s159 = sadd.s32 %s157, %s158
          %s160 = smul.addr %s159, 8
          %s161 = scalar_lea.vmem %s0, %s160
        $region24: #{tpu_custom_call.1} parent=19 // pred_fallthru
          _
        // Predicated region
        $region25: #{tpu_custom_call.1} parent=19 // pred_check
          %p162 = pneg %p74
        $region26: #{tpu_custom_call.1} parent=19 // pred_check_branch
          %164 = sbr.rel (%p162) target = $region28
        $region27: #{tpu_custom_call.1} parent=19 // pred_region
          %p165 = scmp.lt.s32.totalorder %s19, 1
          %s166 = scalar_select %p165, %s19, 1
          %p167 = scmp.lt.s32.totalorder %s20, 0
          %s168 = scalar_select %p167, %s20, 0
          %s169 = sadd.s32 %s168, %s166
          %s170 = scalar_lea.vmem %s1, %s169
        $region28: #{tpu_custom_call.1} parent=19 // pred_fallthru
          _
      $region20: #{tpu_custom_call.1} parent=5 // pred_fallthru
        _
      %p171 = scmp.le.s32.totalorder 1, %s12
      %p172 = scmp.lt.s32.totalorder %s12, 3
      %p173 = pnand %p171, %p172
      %p174 = pneg %p173
      // Predicated region
      $region29: #{tpu_custom_call.1} parent=5 // pred_check
        _
      $region30: #{tpu_custom_call.1} parent=5 // pred_check_branch
        %176 = sbr.rel (%p173) target = $region32
      $region31: #{tpu_custom_call.1} parent=5 // pred_region
        %s177 = ssub.s32 %s12, 1
        %p178 = scmp.lt.s32.totalorder %s21, 1
        %s179 = scalar_select %p178, %s21, 1
        %p180 = scmp.lt.s32.totalorder %s22, 0
        %s181 = scalar_select %p180, %s22, 0
        %s182 = smul.addr %s179, 3
        %s183 = sadd.s32 %s181, %s182
        %s184 = smul.addr %s183, 8
        %s185 = scalar_lea.vmem %s0, %s184
        %p186 = pneg %p52
        %p187 = pneg %p49
        %p188 = scmp.lt.s32.totalorder %s21, 1
        %s189 = scalar_select %p188, %s21, 1
        %p190 = scmp.lt.s32.totalorder %s22, 0
        %s191 = scalar_select %p190, %s22, 0
        %s192 = sadd.s32 %s191, %s189
        %s193 = scalar_lea.vmem %s1, %s192
        %p194 = pneg %p80
        %p195 = pneg %p77
        %p196 = pneg %p101
        %p197 = pneg %p98
        %p198 = pneg %p129
        %p199 = pneg %p126
        %s200 = sand.u32 %s116, 1
        %s201 = scalar_lea.sflag [#allocation3], %s200
        %s202 = sand.u32 %s116, 1
        %s203 = scalar_lea.vmem [#allocation2], %s202
        %p204 = scmp.lt.s32.totalorder %s21, 1
        %s205 = scalar_select %p204, %s21, 1
        %p206 = scmp.lt.s32.totalorder %s22, 0
        %s207 = scalar_select %p206, %s22, 0
        %s208 = smul.addr %s205, 3
        %s209 = sadd.s32 %s207, %s208
        %s210 = smul.addr %s209, 8
        %s211 = scalar_lea.vmem %s0, %s210
        %p212 = scmp.lt.s32.totalorder %s21, 1
        %s213 = scalar_select %p212, %s21, 1
        %p214 = scmp.lt.s32.totalorder %s22, 0
        %s215 = scalar_select %p214, %s22, 0
        %s216 = sadd.s32 %s215, %s213
        %s217 = scalar_lea.vmem %s1, %s216
        %s218 = sadd.s32 %s21, %s22
        %v219 = vld [vmem:[%s211] sm:$0xff]
        %v220 = vld [vmem:[%s211 + $0x8] sm:$0xff]
        %v221 = vld [vmem:[%s211 + $0x10] sm:$0x3]
        %v222 = vld [vmem:[%s217] sm:$0x1]
        %v223 = vlaneseq
        %v224 = vshrl.u32 %v223, 7
        %v225 = vadd.s32 %v224, 8
        %v226 = vadd.s32 %v224, 16
        %v227 = vlaneseq
        %v228 = vshrl.u32 %v227, 7
        %v229 = vsub.s32 0, %v228
        %v230 = vrot.slane %v222, %v229
        %vm231 = vcmp.eq.s32.totalorder %v224, %v230
        %vm232 = vcmp.eq.s32.totalorder %v225, %v230
        %vm233 = vcmp.eq.s32.totalorder %v226, %v230
        %v234 = vsel %vm231, %v219, 0.0
        %v235 = vsel %vm232, %v220, 0.0
        %v236 = vsel %vm233, %v221, 0.0
        %vm237 = vcmask 64512
        %v238 = vsel %vm237, %v234, 0.0
        %v239 = vsel %vm237, %v235, 0.0
        %v240 = vadd.f32 %v238, %v239
        %vm241 = vcmask 58368
        %v242 = vsel %vm241, %v236, 0.0
        %v243 = vadd.f32 %v240, %v242
        %v244 = vrot.slane %v243, 4
        %v245 = vadd.f32 %v243, %v244
        %v246 = vrot.slane %v245, 2
        %v247 = vadd.f32 %v245, %v246
        %v248 = vrot.slane %v247, 1
        %v249 = vadd.f32 %v247, %v248
        %v250 = vadd.f32 %v249, 0.0
        %v251 = vsub.f32 0.0, %v250
        %vm252 = vcmask 57344
        %253 = vst.msk [vmem:[%s203] sm:$0x1] %vm252, %v251
        %s254 = sand.u32 %s116, 1
        %s255 = scalar_lea.sflag [#allocation3], %s254
        %s256 = sand.u32 %s116, 1
        %s257 = scalar_lea.vmem [#allocation2], %s256
        // Predicated region
        $region33: #{tpu_custom_call.1} parent=31 // pred_check
          %p258 = pneg %p126
        $region34: #{tpu_custom_call.1} parent=31 // pred_check_branch
          %260 = sbr.rel (%p258) target = $region36
        $region35: #{tpu_custom_call.1} parent=31 // pred_region
          %s261 = sadd.s32 %s21, %s22
          %s263 = ssub.s32 16, 16
          %264 = vsyncadd %s255, %s263
          %s265 = smul.addr %s261, 16
          %s266 = scalar_lea.hbm %s3, %s265
          %s268 = sshll.u32 %s257, 4
          %s269 = int_to_ptr.vmem [resolvable:$true] %s268
          %271 = dma.vmem_to_hbm [thread:$0]  %s269, 16, %s266, %s255
        $region36: #{tpu_custom_call.1} parent=31 // pred_fallthru
          _
      $region32: #{tpu_custom_call.1} parent=5 // pred_fallthru
        _
      %p272 = scmp.le.s32.totalorder 2, %s12
      // Predicated region
      $region37: #{tpu_custom_call.1} parent=5 // pred_check
        %p273 = pneg %p272
      $region38: #{tpu_custom_call.1} parent=5 // pred_check_branch
        %275 = sbr.rel (%p273) target = $region40
      $region39: #{tpu_custom_call.1} parent=5 // pred_region
        %s276 = ssub.s32 %s12, 2
        // Predicated region
        $region41: #{tpu_custom_call.1} parent=39 // pred_check
          %p277 = pneg %p132
        $region42: #{tpu_custom_call.1} parent=39 // pred_check_branch
          %279 = sbr.rel (%p277) target = $region44
        $region43: #{tpu_custom_call.1} parent=39 // pred_region
          %s280 = sand.u32 %s117, 1
          %s281 = scalar_lea.sflag [#allocation3], %s280
          %s282 = sand.u32 %s117, 1
          %s283 = scalar_lea.vmem [#allocation2], %s282
          %284 = dma.done %s281, 16
        $region44: #{tpu_custom_call.1} parent=39 // pred_fallthru
          _
      $region40: #{tpu_custom_call.1} parent=5 // pred_fallthru
        _
    $region6: #{tpu_custom_call.1} parent=1 // loop_footer
      %s16 = sadd.s32 1, %s12
    $region7: #{tpu_custom_call.1} parent=1 // loop_footer_branch
      %11 = sbr.rel target = $region3
    $region8: #{tpu_custom_call.1} parent=1 // loop_exit
      _
    %285 = vsyncpa [#allocation3], 1
    %s286 = scalar_lea.sflag [#allocation3], 1
    %287 = vsyncpa %s286, 1

</llo_original>
